<compile_context>
chip_gen: v5e
topology: v5e:2x2
jax: 0.10.0
libtpu: 0.0.40
codegen_flags: <defaults>
</compile_context>

<pallas_src>
import numpy as np
import jax
import jax.numpy as jnp
from jax.experimental import pallas as pl
from jax.experimental.pallas import tpu as pltpu


def _postprocess_kernel(w_ref, preds_ref, out_ref):
    # w_ref:     SMEM (M,)        float32  ensemble weights (scalar-prefetched)
    # preds_ref: VMEM (M, C, tT)  any fp   chunk-level logits (one time tile)
    # out_ref:   VMEM (1, tT)     int32    argmax class id per temporal chunk
    m_total = preds_ref.shape[0]

    # Weighted ensemble reduction over the small, static M axis (unrolled VPU
    # FMAs).  Upcast to f32 per member in VMEM: HBM carries the narrow dtype.
    acc = w_ref[0] * preds_ref[0].astype(jnp.float32)
    wsum = w_ref[0]
    for m in range(1, m_total):
        acc = acc + w_ref[m] * preds_ref[m].astype(jnp.float32)
        wsum = wsum + w_ref[m]

    # accumulate_result(): argmax(acc / wsum).  For any wsum != 0 (positive or
    # negative), argmax(acc / wsum) == argmax(acc * wsum) -- they differ by the
    # factor wsum^2 > 0 -- so one scalar multiply replaces a full-tile divide
    # while preserving the reference semantics even for negative weight sums.
    out_ref[...] = jnp.argmax(acc * wsum, axis=0).astype(jnp.int32)[None, :]


def _pick_time_tile(T, M, C, itemsize, *, budget_bytes=8 << 20):
    """Lane-aligned time tile from a VMEM byte budget.

    - tile ~ budget / (M*C*itemsize), rounded down to a multiple of 128 lanes,
    - capped at ceil(T/2) (rounded up to 128) so the parallel grid has >= 2
      steps and can shard across v7x's two TensorCores,
    - tiny videos (T <= 128) use a single full-extent block.
    """
    if T <= 128:
        return T
    per_step = M * C * itemsize            # preds bytes per time step
    t = budget_bytes // max(per_step, 1)
    t = max(128, (t // 128) * 128)
    half = (((T + 1) // 2) + 127) // 128 * 128     # force grid >= 2
    t = min(t, half)
    t_pad = (T + 127) // 128 * 128                 # never exceed padded extent
    return max(128, min(t, t_pad))


def postprocess_accumulate(weights, preds, chunk_size, video_len, *, t_tile=None):
    """Fused weighted-ensemble + argmax at chunk resolution, then label upsample.

    weights: (M,)       float   ensemble weights
    preds:   (M, C, T)  float   chunk-level logits (pass in native bf16/f32)
    Returns: (video_len,) int32 framewise label ids
    """
    M, C, T = preds.shape
    itemsize = jnp.dtype(preds.dtype).itemsize
    if t_tile is None:
        t_tile = _pick_time_tile(T, M, C, itemsize)

    grid_t = pl.cdiv(T, t_tile)            # tail block (if any) is masked by Pallas

    # Explicit VMEM limit: 2x double-buffered preds block + output block + slack,
    # clamped to [32 MiB, 48 MiB] so it clears v5e's 16 MiB scoped default and
    # stays inside v7x's 64 MiB physical VMEM.
    block_bytes = M * C * t_tile * itemsize
    out_block_bytes = t_tile * 4
    vmem_limit = int(min(48 << 20,
                         max(32 << 20, 2 * (block_bytes + out_block_bytes) + (8 << 20))))

    labels = pl.pallas_call(
        _postprocess_kernel,
        out_shape=jax.ShapeDtypeStruct((1, T), jnp.int32),
        grid_spec=pltpu.PrefetchScalarGridSpec(
            num_scalar_prefetch=1,          # weights -> SMEM, passed to index_maps too
            grid=(grid_t,),
            in_specs=[
                pl.BlockSpec((M, C, t_tile), lambda i, w: (0, 0, i)),   # preds tile
            ],
            out_specs=pl.BlockSpec((1, t_tile), lambda i, w: (0, i)),
        ),
        compiler_params=pltpu.CompilerParams(
            dimension_semantics=("parallel",),   # time tiles are independent
            vmem_limit_bytes=vmem_limit),
    )(weights.astype(jnp.float32), preds)

    # upsample_video_value(): repeat each chunk label chunk_size times, truncate.
    # argmax commutes with the repeat, so upsampling int32 labels here is exact
    # and O(T*chunk_size) int32 work instead of O(C*T*chunk_size) float work.
    return jnp.repeat(labels[0], chunk_size,
                      total_repeat_length=T * chunk_size)[:video_len]


def _reference(weights, preds, chunk_size, video_len):
    # Mirrors upsample_video_value + accumulate_result (repeat first, then the
    # sequential weighted sum, divide by sum(weights), argmax over classes).
    up = jnp.repeat(preds.astype(jnp.float32), chunk_size, axis=-1)[:, :, :video_len]
    acc = jnp.zeros(up.shape[1:], jnp.float32)
    for m in range(up.shape[0]):
        acc = acc + weights[m].astype(jnp.float32) * up[m]
    acc = acc / jnp.sum(weights.astype(jnp.float32))
    return jnp.argmax(acc, axis=0).astype(jnp.int32)


if __name__ == "__main__":
    # Deterministic synthetic inputs (no checkpoint / CSV / file I/O).
    # TODO(synk): the dict-based accumulation in forward(), label-name CSV lookup and
    # text-file dumping are host-side bookkeeping with no kernel equivalent.
    key = jax.random.PRNGKey(0)
    k1, k2, k3 = jax.random.split(key, 3)

    # Case 1: tiny single-tile video (T < 128 -> full-extent block, grid = 1).
    M, C, T, chunk_size, video_len = 3, 8, 16, 8, 100
    preds = jax.random.normal(k1, (M, C, T), dtype=jnp.float32).astype(jnp.bfloat16)
    weights = jnp.array([1.0, 0.5, 2.0], dtype=jnp.float32)
    out = jax.block_until_ready(postprocess_accumulate(weights, preds, chunk_size, video_len))
    ref = _reference(weights, preds, chunk_size, video_len)
    assert out.shape == (video_len,), out.shape
    np.testing.assert_array_equal(np.asarray(out), np.asarray(ref))

    # Case 2: T not a multiple of 128 -> cdiv grid with a masked tail block
    # (auto tile = 256, grid = 2), preds streamed as bf16.
    M2, C2, T2, cs2, vl2 = 2, 16, 300, 4, 1100
    preds2 = jax.random.normal(k2, (M2, C2, T2), dtype=jnp.float32).astype(jnp.bfloat16)
    weights2 = jnp.array([0.7, 1.3], dtype=jnp.float32)
    out2 = jax.block_until_ready(postprocess_accumulate(weights2, preds2, cs2, vl2))
    ref2 = _reference(weights2, preds2, cs2, vl2)
    assert out2.shape == (vl2,), out2.shape
    np.testing.assert_array_equal(np.asarray(out2), np.asarray(ref2))

    # Case 3: larger lane-aligned video; budget/half-T cap gives tile 1536,
    # grid = 2 (exercises the v7x dual-TC-friendly tiling path).
    M3, C3, T3, cs3, vl3 = 4, 32, 3072, 2, 6000
    preds3 = jax.random.normal(k3, (M3, C3, T3), dtype=jnp.float32).astype(jnp.bfloat16)
    weights3 = jnp.array([0.4, 1.1, 0.9, 1.6], dtype=jnp.float32)
    out3 = jax.block_until_ready(postprocess_accumulate(weights3, preds3, cs3, vl3))
    ref3 = _reference(weights3, preds3, cs3, vl3)
    assert out3.shape == (vl3,), out3.shape
    np.testing.assert_array_equal(np.asarray(out3), np.asarray(ref3))

    print("KERNEL_OK")
</pallas_src>

<mosaic_0001>
module attributes {stable_mosaic.version = 11 : i64} {
  func.func @_postprocess_kernel(%arg0: i32, %arg1: memref<3xf32, #tpu.memory_space<smem>>, %arg2: memref<3x8x16xbf16, #tpu.memory_space<vmem>>, %arg3: memref<1x16xi32, #tpu.memory_space<vmem>>) attributes {dimension_semantics = [#tpu.dimension_semantics<parallel>], iteration_bounds = array<i64: 1>, scalar_prefetch = 1 : i64, scratch_operands = 0 : i64, tpu.core_type = #tpu.core_type<tc>, window_params = [{transform_indices = @transform_0, window_bounds = array<i64: 3, 8, 16>}, {transform_indices = @transform_1, window_bounds = array<i64: 1, 16>}]} {
    %c0 = arith.constant 0 : index
    %0 = memref.load %arg1[%c0] : memref<3xf32, #tpu.memory_space<smem>>
    %c0_0 = arith.constant 0 : index
    %c0_1 = arith.constant 0 : index
    %c0_2 = arith.constant 0 : index
    %1 = vector.load %arg2[%c0_0, %c0_1, %c0_2] : memref<3x8x16xbf16, #tpu.memory_space<vmem>>, vector<1x8x16xbf16>
    %2 = vector.shape_cast %1 : vector<1x8x16xbf16> to vector<8x16xbf16>
    %3 = arith.extf %2 : vector<8x16xbf16> to vector<8x16xf32>
    %4 = vector.broadcast %0 : f32 to vector<8x16xf32>
    %5 = arith.mulf %4, %3 : vector<8x16xf32>
    %c0_3 = arith.constant 0 : index
    %6 = memref.load %arg1[%c0_3] : memref<3xf32, #tpu.memory_space<smem>>
    %c1 = arith.constant 1 : index
    %7 = memref.load %arg1[%c1] : memref<3xf32, #tpu.memory_space<smem>>
    %c1_4 = arith.constant 1 : index
    %c0_5 = arith.constant 0 : index
    %c0_6 = arith.constant 0 : index
    %8 = vector.load %arg2[%c1_4, %c0_5, %c0_6] : memref<3x8x16xbf16, #tpu.memory_space<vmem>>, vector<1x8x16xbf16>
    %9 = vector.shape_cast %8 : vector<1x8x16xbf16> to vector<8x16xbf16>
    %10 = arith.extf %9 : vector<8x16xbf16> to vector<8x16xf32>
    %11 = vector.broadcast %7 : f32 to vector<8x16xf32>
    %12 = arith.mulf %11, %10 : vector<8x16xf32>
    %13 = arith.addf %5, %12 : vector<8x16xf32>
    %c1_7 = arith.constant 1 : index
    %14 = memref.load %arg1[%c1_7] : memref<3xf32, #tpu.memory_space<smem>>
    %15 = arith.addf %6, %14 : f32
    %c2 = arith.constant 2 : index
    %16 = memref.load %arg1[%c2] : memref<3xf32, #tpu.memory_space<smem>>
    %c2_8 = arith.constant 2 : index
    %c0_9 = arith.constant 0 : index
    %c0_10 = arith.constant 0 : index
    %17 = vector.load %arg2[%c2_8, %c0_9, %c0_10] : memref<3x8x16xbf16, #tpu.memory_space<vmem>>, vector<1x8x16xbf16>
    %18 = vector.shape_cast %17 : vector<1x8x16xbf16> to vector<8x16xbf16>
    %19 = arith.extf %18 : vector<8x16xbf16> to vector<8x16xf32>
    %20 = vector.broadcast %16 : f32 to vector<8x16xf32>
    %21 = arith.mulf %20, %19 : vector<8x16xf32>
    %22 = arith.addf %13, %21 : vector<8x16xf32>
    %c2_11 = arith.constant 2 : index
    %23 = memref.load %arg1[%c2_11] : memref<3xf32, #tpu.memory_space<smem>>
    %24 = arith.addf %15, %23 : f32
    %25 = vector.broadcast %24 : f32 to vector<8x16xf32>
    %26 = arith.mulf %22, %25 : vector<8x16xf32>
    %27 = tpu.reduce_index %26 {axis = 0 : i32, kind = #tpu.reduction_kind<arg_max>} : vector<8x16xf32> -> vector<16xi32>
    %28 = vector.shape_cast %27 : vector<16xi32> to vector<1x16xi32>
    %c0_12 = arith.constant 0 : index
    %c0_13 = arith.constant 0 : index
    %29 = vector.load %arg3[%c0_12, %c0_13] : memref<1x16xi32, #tpu.memory_space<vmem>>, vector<1x16xi32>
    tpu.vector_store %arg3[%c0_12, %c0_13], %28 {strides = array<i32>} : memref<1x16xi32, #tpu.memory_space<vmem>>, vector<1x16xi32>,
    return
  }
  func.func @transform_0(%arg0: i32, %arg1: memref<3xf32, #tpu.memory_space<smem>>) -> (i32, i32, i32) {
    %c0_i32 = arith.constant 0 : i32
    %c0_i32_0 = arith.constant 0 : i32
    %c0_i32_1 = arith.constant 0 : i32
    return %c0_i32, %c0_i32_0, %arg0 : i32, i32, i32
  }
  func.func @transform_1(%arg0: i32, %arg1: memref<3xf32, #tpu.memory_space<smem>>) -> (i32, i32) {
    %c0_i32 = arith.constant 0 : i32
    %c0_i32_0 = arith.constant 0 : i32
    return %c0_i32, %arg0 : i32, i32
  }
}

</mosaic_0001>

<llo_original>
// kernel: tpu_custom_call.1
$region0: #{tpu_custom_call.1}
  #allocation0 [shape = 'u32[]', space=smem, size = 0x4, offset = 0x4, fixed_abs, tag = 'smem constant byte address 0x4 - core index']
  #allocation1 [shape = 'u32[72,128]{1,0:T(1,128)}', space=vmem, size = 0x9000, scoped, tag = 'internal scratch']
  #allocation2 [shape = 's32[1]{0}', space=sflag, size = 0x4, scoped, tag = 'scoped memory for tpu_custom_call.1']
  #allocation3 [shape = 'u8[512]{0}', space=smem, size = 0x200, scoped, tag = 'prefetched SMEM operand 0']
  %s0 = inlined_call_operand.hbm [shape: f32[3], index: 0, kind: input, shape index: {}]
  %s1 = inlined_call_operand.hbm [shape: bf16[3,8,16], index: 1, kind: input, shape index: {}]
  %s2 = inlined_call_operand.hbm [shape: s32[1,16], index: 2, kind: output, shape index: {}]
  %s3 = sld [smem:[#allocation0]]
  $region18: #{tpu_custom_call.1} parent=0
    _
  %s5 = ssub.s32 1, %s3
  %s6 = scalar_select 0, %s5, %s3
  %s8 = sshll.u32 %s0, 4
  %s9 = int_to_ptr.hbm [resolvable:$true] %s8
  %11 = dma.hbm_to_smem %s9, 16, [#allocation3], [#allocation2]
  %13 = dma.done [#allocation2], 16
  %14 = sfence
  $region1: #{tpu_custom_call.1} parent=0
    #allocation4 [shape = 'u8[6144]{0}', space=vmem, size = 0x1800, scoped, tag = 'input window, operand 1, single buffered']
    #allocation5 [shape = 's32[1]{0}', space=sflag, size = 0x4, scoped, tag = 'scoped memory for tpu_custom_call.1']
    #allocation6 [shape = 's32[1]{0}', space=sflag, size = 0x4, scoped, tag = 'scoped memory for tpu_custom_call.1']
    #allocation7 [shape = 'u8[512]{0}', space=vmem, size = 0x400, scoped, tag = 'output window, operand 0, single buffered']
    %15 = vsyncpa [#allocation5], 0
    %16 = vsyncpa [#allocation6], 0
    // Predicated region
    $region2: #{tpu_custom_call.1} parent=1 // pred_check
      _
    $region3: #{tpu_custom_call.1} parent=1 // pred_check_branch
      %18 = sbr.rel (0) target = $region5
    $region4: #{tpu_custom_call.1} parent=1 // pred_region
      %20 = vsyncadd [#allocation5], 0
      %s21 = sshll.u32 %s1, 4
      %s22 = int_to_ptr.hbm [resolvable:$true] %s21
      %s23 = sshll.u32 [#allocation4], 4
      %s24 = int_to_ptr.vmem [resolvable:$true] %s23
      %29 = dma.hbm_to_vmem [thread:$0]  %s22, 192, %s24, [#allocation5], 64, 64, 4
    $region5: #{tpu_custom_call.1} parent=1 // pred_fallthru
      _
    // Predicated region
    $region6: #{tpu_custom_call.1} parent=1 // pred_check
      _
    $region7: #{tpu_custom_call.1} parent=1 // pred_check_branch
      %31 = sbr.rel (0) target = $region9
    $region8: #{tpu_custom_call.1} parent=1 // pred_region
      %33 = dma.done [#allocation5], 192
    $region9: #{tpu_custom_call.1} parent=1 // pred_fallthru
      _
    %s34 = sld [smem:[#allocation3]]
    %v35 = vld [vmem:[#allocation4] sm:$0xf]
    %v36 = vunpack.c.l.bf16 %v35
    %v37 = vstv %s34
    %v38 = vmul.f32 %v37, %v36
    %s39 = sld [smem:[#allocation3 + $0x1]]
    %s40 = scalar_lea.vmem [#allocation4], 4
    %v41 = vld [vmem:[%s40] sm:$0xf]
    %v42 = vunpack.c.l.bf16 %v41
    %v43 = vstv %s39
    %v44 = vmul.f32 %v43, %v42
    %v45 = vadd.f32 %v38, %v44
    %s46 = sadd.f32 %s34, %s39
    %s47 = sld [smem:[#allocation3 + $0x2]]
    %s48 = scalar_lea.vmem [#allocation4], 8
    %v49 = vld [vmem:[%s48] sm:$0xf]
    %v50 = vunpack.c.l.bf16 %v49
    %v51 = vstv %s47
    %v52 = vmul.f32 %v51, %v50
    %v53 = vadd.f32 %v45, %v52
    %s54 = sadd.f32 %s46, %s47
    %v55 = vstv %s54
    %v56 = vmul.f32 %v53, %v55
    %v57 = vlaneseq
    %v58 = vshrl.u32 %v57, 7
    %vm59 = vcmask 130048
    %v60 = vsel %vm59, %v56, -inf
    %v61 = vrot.slane %v60, 4
    %v62 = vrot.slane %v58, 4
    %vm63 = vcmp.ge.f32.partialorder %v60, %v61
    %v64 = vsel %vm63, %v60, %v61
    %v65 = vsel %vm63, %v58, %v62
    %v66 = vrot.slane %v64, 6
    %v67 = vrot.slane %v65, 6
    %vm68 = vcmp.ge.f32.partialorder %v64, %v66
    %v69 = vsel %vm68, %v64, %v66
    %v70 = vsel %vm68, %v65, %v67
    %v71 = vrot.slane %v69, 7
    %v72 = vrot.slane %v70, 7
    %vm73 = vcmp.ge.f32.partialorder %v69, %v71
    %v74 = vsel %vm73, %v70, %v72
    %vm75 = vcmask 122880
    %76 = vst.msk [vmem:[#allocation7] sm:$0x1] %vm75, %v74
    // Predicated region
    $region10: #{tpu_custom_call.1} parent=1 // pred_check
      _
    $region11: #{tpu_custom_call.1} parent=1 // pred_check_branch
      %78 = sbr.rel (0) target = $region13
    $region12: #{tpu_custom_call.1} parent=1 // pred_region
      %80 = vsyncadd [#allocation6], 0
      %s82 = sshll.u32 [#allocation7], 4
      %s83 = int_to_ptr.vmem [resolvable:$true] %s82
      %s84 = sshll.u32 %s2, 4
      %s85 = int_to_ptr.hbm [resolvable:$true] %s84
      %87 = dma.vmem_to_hbm [thread:$0]  %s83, 16, %s85, [#allocation6]
    $region13: #{tpu_custom_call.1} parent=1 // pred_fallthru
      _
    // Predicated region
    $region14: #{tpu_custom_call.1} parent=1 // pred_check
      _
    $region15: #{tpu_custom_call.1} parent=1 // pred_check_branch
      %89 = sbr.rel (0) target = $region17
    $region16: #{tpu_custom_call.1} parent=1 // pred_region
      %91 = dma.done [#allocation6], 16
    $region17: #{tpu_custom_call.1} parent=1 // pred_fallthru
      _
    %92 = vsyncpa [#allocation5], 1
    %93 = vsyncpa [#allocation6], 1

</llo_original>
